<compile_context>
chip_gen: v7x
topology: tpu7x:2x2x1
jax: 0.10.0
libtpu: 0.0.40
codegen_flags: <defaults>
</compile_context>

<pallas_src>
import functools

import jax
import jax.numpy as jnp
from jax import lax
from jax.experimental import pallas as pl
from jax.experimental.pallas import tpu as pltpu

_EPS = 1e-6        # matches torch.nn.functional.pairwise_distance default eps
_NUM_SLOTS = 2     # leading "parallel" axis: both TCs on v7x, harmless on v5e/v6e


def _triplet_loss_kernel(margin_ref, a_ref, p_ref, n_ref, o_ref, acc_ref,
                         *, true_b, tile_b, tiles_per_slot):
    c = pl.program_id(0)   # parallel slot (TensorCore on v7x)
    i = pl.program_id(1)   # sequential batch-tile index within the slot

    @pl.when(i == 0)
    def _init():
        acc_ref[...] = jnp.zeros_like(acc_ref)

    a = a_ref[...].astype(jnp.float32)
    p = p_ref[...].astype(jnp.float32)
    n = n_ref[...].astype(jnp.float32)

    # torch adds eps to the *difference* before the norm: (a - x + eps).
    a_eps = a + _EPS
    dp = a_eps - p
    dn = a_eps - n

    # keepdims keeps per-row distances as 2-D (TB, 1) tiles (no 1-D relayout).
    dist_pos = jnp.sqrt(jnp.sum(dp * dp, axis=-1, keepdims=True))
    dist_neg = jnp.sqrt(jnp.sum(dn * dn, axis=-1, keepdims=True))

    hinge = jnp.maximum(dist_pos - dist_neg + margin_ref[0], 0.0)   # (TB, 1)

    # Select-based mask for rows past the true batch (ragged last tile and the
    # clamped duplicate tile on the second slot); select, not multiply, so any
    # NaN/Inf from uninitialized padded rows is dropped, not propagated.
    row_start = (c * tiles_per_slot + i) * tile_b
    row_ids = row_start + lax.broadcasted_iota(jnp.int32, hinge.shape, 0)
    hinge = jnp.where(row_ids < true_b, hinge, 0.0)

    acc_ref[...] += hinge   # resident (TB, 1) per-row partial sums

    @pl.when(i == pl.num_programs(1) - 1)
    def _finalize():
        o_ref[...] = jnp.sum(acc_ref[...], keepdims=True)   # (1, 1) slot sum


def _round_up(x, m):
    return ((x + m - 1) // m) * m


def _vmem_limit_bytes():
    """Per-generation scoped-VMEM budget (v5e/v6e: 128 MiB phys, v7x: 64 MiB)."""
    try:
        cap = int(pltpu.get_tpu_info().vmem_capacity_bytes)
    except Exception:
        cap = 64 * 1024 * 1024   # conservative fallback: v7x per-TC VMEM
    return min(96 * 1024 * 1024, cap * 3 // 4)


def triplet_loss(anchor, positive, negative, margin=1.0):
    """Pallas TPU implementation of TripletLoss.forward. Returns scalar f32."""
    assert anchor.shape == positive.shape == negative.shape
    assert anchor.ndim == 2
    B, D = anchor.shape
    itemsize = jnp.dtype(anchor.dtype).itemsize

    # Sublane packing multiple for the HBM-side dtype (f32: 8, bf16: 16, 8b: 32).
    pack = max(8, 32 // itemsize)

    vmem_limit = _vmem_limit_bytes()
    # ~1/3 of the scoped limit feeds the 3 inputs x 2 pipeline buffers; the rest
    # is headroom for in-kernel f32 temporaries, the scratch and the output.
    buffer_budget = vmem_limit // 3
    per_row_bytes = 3 * 2 * D * itemsize
    TB = buffer_budget // per_row_bytes
    TB = min(TB, 8192, _round_up(B, pack))
    TB = max(pack, TB // pack * pack)

    num_tiles = pl.cdiv(B, TB)
    num_slots = _NUM_SLOTS if num_tiles >= _NUM_SLOTS else 1
    tiles_per_slot = pl.cdiv(num_tiles, num_slots)

    def in_map(c, i):
        # Clamp so the DMA never walks past the last real block; any fully
        # out-of-range (duplicate) tile is zeroed by the in-kernel row mask.
        return (jnp.minimum(c * tiles_per_slot + i, num_tiles - 1), 0)

    tile_spec = pl.BlockSpec((TB, D), in_map)
    margin_arr = jnp.asarray([margin], dtype=jnp.float32)

    kernel = functools.partial(
        _triplet_loss_kernel,
        true_b=B, tile_b=TB, tiles_per_slot=tiles_per_slot)

    out = pl.pallas_call(
        kernel,
        out_shape=jax.ShapeDtypeStruct((num_slots, 1), jnp.float32),
        grid=(num_slots, tiles_per_slot),
        in_specs=[
            pl.BlockSpec(memory_space=pltpu.MemorySpace.SMEM),   # margin scalar
            tile_spec, tile_spec, tile_spec,
        ],
        out_specs=pl.BlockSpec((1, 1), lambda c, i: (c, 0)),
        scratch_shapes=[pltpu.VMEM((TB, 1), jnp.float32)],
        compiler_params=pltpu.CompilerParams(
            dimension_semantics=("parallel", "arbitrary"),
            vmem_limit_bytes=vmem_limit,
        ),
        cost_estimate=pl.CostEstimate(
            flops=8 * B * D,
            transcendentals=2 * B,
            bytes_accessed=3 * B * D * itemsize + 4 * (num_slots + 1),
        ),
    )(margin_arr, anchor, positive, negative)

    # Per-slot hinge sums -> exact mean over the true batch.
    return jnp.sum(out) * (1.0 / B)


def _reference(anchor, positive, negative, margin=1.0):
    a = anchor.astype(jnp.float32)
    p = positive.astype(jnp.float32)
    n = negative.astype(jnp.float32)
    dpos = jnp.sqrt(jnp.sum((a - p + _EPS) ** 2, axis=-1))
    dneg = jnp.sqrt(jnp.sum((a - n + _EPS) ** 2, axis=-1))
    return jnp.mean(jnp.maximum(dpos - dneg + margin, 0.0))


if __name__ == "__main__":
    key = jax.random.PRNGKey(0)

    # Case 1: module-typical small embedding batch.
    k_a, k_p, k_n = jax.random.split(key, 3)
    B, D = 8, 32
    anchor = jax.random.normal(k_a, (B, D), dtype=jnp.float32)
    positive = jax.random.normal(k_p, (B, D), dtype=jnp.float32)
    negative = jax.random.normal(k_n, (B, D), dtype=jnp.float32)

    loss = jax.block_until_ready(triplet_loss(anchor, positive, negative, margin=1.0))
    ref = _reference(anchor, positive, negative, margin=1.0)
    assert jnp.allclose(loss, ref, atol=1e-5, rtol=1e-5), (loss, ref)

    # Case 2: ragged batch + non-128 feature dim (no wrapper padding anymore).
    k_a2, k_p2, k_n2 = jax.random.split(jax.random.PRNGKey(1), 3)
    B2, D2 = 13, 96
    a2 = jax.random.normal(k_a2, (B2, D2), dtype=jnp.float32)
    p2 = jax.random.normal(k_p2, (B2, D2), dtype=jnp.float32)
    n2 = jax.random.normal(k_n2, (B2, D2), dtype=jnp.float32)

    loss2 = jax.block_until_ready(triplet_loss(a2, p2, n2, margin=0.5))
    ref2 = _reference(a2, p2, n2, margin=0.5)
    assert jnp.allclose(loss2, ref2, atol=1e-5, rtol=1e-5), (loss2, ref2)

    print("KERNEL_OK")
</pallas_src>

<mosaic_0001>
module attributes {stable_mosaic.version = 11 : i64} {
  func.func @_triplet_loss_kernel(%arg0: i32, %arg1: i32, %arg2: memref<1xf32, #tpu.memory_space<smem>>, %arg3: memref<8x32xf32, #tpu.memory_space<vmem>>, %arg4: memref<8x32xf32, #tpu.memory_space<vmem>>, %arg5: memref<8x32xf32, #tpu.memory_space<vmem>>, %arg6: memref<1x1xf32, #tpu.memory_space<vmem>>, %arg7: memref<8x1xf32, #tpu.memory_space<vmem>>) attributes {dimension_semantics = [#tpu.dimension_semantics<parallel>, #tpu.dimension_semantics<arbitrary>], iteration_bounds = array<i64: 1, 1>, scalar_prefetch = 0 : i64, scratch_operands = 1 : i64, tpu.core_type = #tpu.core_type<tc>, window_params = [{transform_indices = @transform_0, window_bounds = array<i64: 1>}, {transform_indices = @transform_1, window_bounds = array<i64: 8, 32>}, {transform_indices = @transform_2, window_bounds = array<i64: 8, 32>}, {transform_indices = @transform_3, window_bounds = array<i64: 8, 32>}, {transform_indices = @transform_4, window_bounds = array<i64: 1, 1>}]} {
    %c0_i32 = arith.constant 0 : i32
    %0 = arith.cmpi eq, %arg1, %c0_i32 : i32
    %1 = arith.extui %0 : i1 to i32
    %c0_i32_0 = arith.constant 0 : i32
    %2 = arith.cmpi ne, %1, %c0_i32_0 : i32
    scf.if %2 {
      %cst_18 = arith.constant 0.000000e+00 : f32
      %40 = vector.broadcast %cst_18 : f32 to vector<8x1xf32>
      %c0_19 = arith.constant 0 : index
      %c0_20 = arith.constant 0 : index
      %41 = vector.load %arg7[%c0_19, %c0_20] : memref<8x1xf32, #tpu.memory_space<vmem>>, vector<8x1xf32>
      tpu.vector_store %arg7[%c0_19, %c0_20], %40 {strides = array<i32>} : memref<8x1xf32, #tpu.memory_space<vmem>>, vector<8x1xf32>,
    } else {
    }
    %c0 = arith.constant 0 : index
    %c0_1 = arith.constant 0 : index
    %3 = vector.load %arg3[%c0, %c0_1] : memref<8x32xf32, #tpu.memory_space<vmem>>, vector<8x32xf32>
    %c0_2 = arith.constant 0 : index
    %c0_3 = arith.constant 0 : index
    %4 = vector.load %arg4[%c0_2, %c0_3] : memref<8x32xf32, #tpu.memory_space<vmem>>, vector<8x32xf32>
    %c0_4 = arith.constant 0 : index
    %c0_5 = arith.constant 0 : index
    %5 = vector.load %arg5[%c0_4, %c0_5] : memref<8x32xf32, #tpu.memory_space<vmem>>, vector<8x32xf32>
    %cst = arith.constant 9.99999997E-7 : f32
    %6 = vector.broadcast %cst : f32 to vector<8x32xf32>
    %7 = arith.addf %3, %6 : vector<8x32xf32>
    %8 = arith.subf %7, %4 : vector<8x32xf32>
    %9 = arith.subf %7, %5 : vector<8x32xf32>
    %10 = arith.mulf %8, %8 : vector<8x32xf32>
    %cst_6 = arith.constant dense<0.000000e+00> : vector<8xf32>
    %11 = vector.multi_reduction <add>, %10, %cst_6 [1] : vector<8x32xf32> to vector<8xf32>
    %12 = vector.shape_cast %11 : vector<8xf32> to vector<8x1xf32>
    %13 = math.sqrt %12 : vector<8x1xf32>
    %14 = arith.mulf %9, %9 : vector<8x32xf32>
    %cst_7 = arith.constant dense<0.000000e+00> : vector<8xf32>
    %15 = vector.multi_reduction <add>, %14, %cst_7 [1] : vector<8x32xf32> to vector<8xf32>
    %16 = vector.shape_cast %15 : vector<8xf32> to vector<8x1xf32>
    %17 = math.sqrt %16 : vector<8x1xf32>
    %18 = arith.subf %13, %17 : vector<8x1xf32>
    %c0_8 = arith.constant 0 : index
    %19 = memref.load %arg2[%c0_8] : memref<1xf32, #tpu.memory_space<smem>>
    %20 = vector.broadcast %19 : f32 to vector<8x1xf32>
    %21 = arith.addf %18, %20 : vector<8x1xf32>
    %cst_9 = arith.constant 0.000000e+00 : f32
    %22 = vector.broadcast %cst_9 : f32 to vector<8x1xf32>
    %23 = arith.maximumf %21, %22 : vector<8x1xf32>
    %c1_i32 = arith.constant 1 : i32
    %24 = arith.muli %arg0, %c1_i32 : i32
    %25 = arith.addi %24, %arg1 : i32
    %c8_i32 = arith.constant 8 : i32
    %26 = arith.muli %25, %c8_i32 : i32
    %27 = tpu.iota {dimensions = array<i32: 0>} : vector<8x1xi32>
    %28 = vector.broadcast %26 : i32 to vector<8x1xi32>
    %29 = arith.addi %28, %27 : vector<8x1xi32>
    %c8_i32_10 = arith.constant 8 : i32
    %30 = vector.broadcast %c8_i32_10 : i32 to vector<8x1xi32>
    %31 = arith.cmpi slt, %29, %30 : vector<8x1xi32>
    %cst_11 = arith.constant 0.000000e+00 : f32
    %32 = vector.broadcast %cst_11 : f32 to vector<8x1xf32>
    %33 = arith.select %31, %23, %32 : vector<8x1xi1>, vector<8x1xf32>
    %c0_12 = arith.constant 0 : index
    %c0_13 = arith.constant 0 : index
    %34 = vector.load %arg7[%c0_12, %c0_13] : memref<8x1xf32, #tpu.memory_space<vmem>>, vector<8x1xf32>
    %35 = arith.addf %34, %33 : vector<8x1xf32>
    %c0_14 = arith.constant 0 : index
    %c0_15 = arith.constant 0 : index
    %36 = vector.load %arg7[%c0_14, %c0_15] : memref<8x1xf32, #tpu.memory_space<vmem>>, vector<8x1xf32>
    tpu.vector_store %arg7[%c0_14, %c0_15], %35 {strides = array<i32>} : memref<8x1xf32, #tpu.memory_space<vmem>>, vector<8x1xf32>,
    %c0_i32_16 = arith.constant 0 : i32
    %37 = arith.cmpi eq, %arg1, %c0_i32_16 : i32
    %38 = arith.extui %37 : i1 to i32
    %c0_i32_17 = arith.constant 0 : i32
    %39 = arith.cmpi ne, %38, %c0_i32_17 : i32
    scf.if %39 {
      %c0_18 = arith.constant 0 : index
      %c0_19 = arith.constant 0 : index
      %40 = vector.load %arg7[%c0_18, %c0_19] : memref<8x1xf32, #tpu.memory_space<vmem>>, vector<8x1xf32>
      %41 = vector.shape_cast %40 : vector<8x1xf32> to vector<1x8x1xf32>
      %cst_20 = arith.constant dense<0.000000e+00> : vector<1xf32>
      %42 = vector.multi_reduction <add>, %41, %cst_20 [1, 2] : vector<1x8x1xf32> to vector<1xf32>
      %43 = vector.shape_cast %42 : vector<1xf32> to vector<1x1x1xf32>
      %44 = vector.extract %43[0, 0, 0] : f32 from vector<1x1x1xf32>
      %45 = vector.broadcast %44 : f32 to vector<1x1xf32>
      %c0_21 = arith.constant 0 : index
      %c0_22 = arith.constant 0 : index
      %46 = vector.load %arg6[%c0_21, %c0_22] : memref<1x1xf32, #tpu.memory_space<vmem>>, vector<1x1xf32>
      tpu.vector_store %arg6[%c0_21, %c0_22], %45 {strides = array<i32>} : memref<1x1xf32, #tpu.memory_space<vmem>>, vector<1x1xf32>,
    } else {
    }
    return
  }
  func.func @transform_0(%arg0: i32, %arg1: i32) -> i32 {
    %c0_i32 = arith.constant 0 : i32
    %c0_i32_0 = arith.constant 0 : i32
    return %c0_i32 : i32
  }
  func.func @transform_1(%arg0: i32, %arg1: i32) -> (i32, i32) {
    %c1_i32 = arith.constant 1 : i32
    %0 = arith.muli %arg0, %c1_i32 : i32
    %1 = arith.addi %0, %arg1 : i32
    %c0_i32 = arith.constant 0 : i32
    %2 = arith.minsi %1, %c0_i32 : i32
    %c0_i32_0 = arith.constant 0 : i32
    %c0_i32_1 = arith.constant 0 : i32
    return %2, %c0_i32_0 : i32, i32
  }
  func.func @transform_2(%arg0: i32, %arg1: i32) -> (i32, i32) {
    %c1_i32 = arith.constant 1 : i32
    %0 = arith.muli %arg0, %c1_i32 : i32
    %1 = arith.addi %0, %arg1 : i32
    %c0_i32 = arith.constant 0 : i32
    %2 = arith.minsi %1, %c0_i32 : i32
    %c0_i32_0 = arith.constant 0 : i32
    %c0_i32_1 = arith.constant 0 : i32
    return %2, %c0_i32_0 : i32, i32
  }
  func.func @transform_3(%arg0: i32, %arg1: i32) -> (i32, i32) {
    %c1_i32 = arith.constant 1 : i32
    %0 = arith.muli %arg0, %c1_i32 : i32
    %1 = arith.addi %0, %arg1 : i32
    %c0_i32 = arith.constant 0 : i32
    %2 = arith.minsi %1, %c0_i32 : i32
    %c0_i32_0 = arith.constant 0 : i32
    %c0_i32_1 = arith.constant 0 : i32
    return %2, %c0_i32_0 : i32, i32
  }
  func.func @transform_4(%arg0: i32, %arg1: i32) -> (i32, i32) {
    %c0_i32 = arith.constant 0 : i32
    %c0_i32_0 = arith.constant 0 : i32
    return %arg0, %c0_i32 : i32, i32
  }
}

</mosaic_0001>

<llo_original>
// kernel: tpu_custom_call.1
$region0: #{tpu_custom_call.1}
  #allocation0 [shape = 'u32[]', space=smem, size = 0x4, offset = 0x4, fixed_abs, tag = 'smem constant byte address 0x4 - core index']
  #allocation1 [shape = 'u32[144,128]{1,0:T(1,128)}', space=vmem, size = 0x12000, scoped, tag = 'internal scratch']
  #allocation2 [shape = 'f32[8,1]{1,0:T(8,128)}', space=vmem, size = 0x1000, scoped, tag = 'scratch operand']
  #allocation3 [shape = 'f32[1]{0:T(128)S(6)}', space=smem, size = 0x200, scoped, tag = 'scoped memory for tpu_custom_call.1']
  %s0 = inlined_call_operand.<no memory space> [shape: f32[1], index: 0, kind: input, shape index: {}]
  %s1 = inlined_call_operand.hbm [shape: f32[8,32], index: 1, kind: input, shape index: {}]
  %s2 = inlined_call_operand.hbm [shape: f32[8,32], index: 2, kind: input, shape index: {}]
  %s3 = inlined_call_operand.vmem [shape: f32[8,32], index: 3, kind: input, shape index: {}]
  %s4 = inlined_call_operand.hbm [shape: f32[1,1], index: 4, kind: output, shape index: {}]
  %s5 = sld [smem:[#allocation0]]
  $region42: #{tpu_custom_call.1} parent=0
    _
  %s7 = ssub.s32 1, %s5
  %s8 = scalar_select 0, %s7, %s5
  %9 = sst [smem:[#allocation3]] %s0
  $region1: #{tpu_custom_call.1} parent=0
    #allocation4 [shape = 'u8[4096]{0}', space=vmem, size = 0x1000, scoped, tag = 'input window, operand 1, single buffered']
    #allocation5 [shape = 's32[1]{0}', space=sflag, size = 0x4, scoped, tag = 'scoped memory for tpu_custom_call.1']
    #allocation6 [shape = 's32[1]{0}', space=sflag, size = 0x4, scoped, tag = 'scoped memory for tpu_custom_call.1']
    #allocation7 [shape = 'u8[4096]{0}', space=vmem, size = 0x1000, scoped, tag = 'input window, operand 2, single buffered']
    #allocation8 [shape = 's32[1]{0}', space=sflag, size = 0x4, scoped, tag = 'scoped memory for tpu_custom_call.1']
    #allocation9 [shape = 'u8[512]{0}', space=vmem, size = 0x400, scoped, tag = 'output window, operand 0, single buffered']
    %10 = vsyncpa [#allocation5], 0
    %11 = vsyncpa [#allocation8], 0
    %12 = vsyncpa [#allocation6], 0
    // Predicated region
    $region2: #{tpu_custom_call.1} parent=1 // pred_check
      _
    $region3: #{tpu_custom_call.1} parent=1 // pred_check_branch
      %14 = sbr.rel (0) target = $region5
    $region4: #{tpu_custom_call.1} parent=1 // pred_region
      _
    $region5: #{tpu_custom_call.1} parent=1 // pred_fallthru
      _
    // Predicated region
    $region6: #{tpu_custom_call.1} parent=1 // pred_check
      _
    $region7: #{tpu_custom_call.1} parent=1 // pred_check_branch
      %16 = sbr.rel (0) target = $region9
    $region8: #{tpu_custom_call.1} parent=1 // pred_region
      %s17 = sadd.s32 0, 0
      %p18 = scmp.lt.s32.totalorder %s17, 0
      %s19 = scalar_select %p18, %s17, 0
      %s21 = ssub.s32 128, 128
      %22 = vsyncadd [#allocation5], %s21
      %s23 = smul.addr %s19, 128
      %s24 = scalar_lea.hbm %s1, %s23
      %s26 = sshll.u32 [#allocation4], 4
      %s27 = int_to_ptr.vmem [resolvable:$true] %s26
      %29 = dma.hbm_to_vmem [thread:$0]  %s24, 128, %s27, [#allocation5]
    $region9: #{tpu_custom_call.1} parent=1 // pred_fallthru
      _
    // Predicated region
    $region10: #{tpu_custom_call.1} parent=1 // pred_check
      _
    $region11: #{tpu_custom_call.1} parent=1 // pred_check_branch
      %31 = sbr.rel (0) target = $region13
    $region12: #{tpu_custom_call.1} parent=1 // pred_region
      %s32 = sadd.s32 0, 0
      %p33 = scmp.lt.s32.totalorder %s32, 0
      %s34 = scalar_select %p33, %s32, 0
      %s36 = ssub.s32 128, 128
      %37 = vsyncadd [#allocation8], %s36
      %s38 = smul.addr %s34, 128
      %s39 = scalar_lea.hbm %s2, %s38
      %s41 = sshll.u32 [#allocation7], 4
      %s42 = int_to_ptr.vmem [resolvable:$true] %s41
      %44 = dma.hbm_to_vmem [thread:$0]  %s39, 128, %s42, [#allocation8]
    $region13: #{tpu_custom_call.1} parent=1 // pred_fallthru
      _
    // Predicated region
    $region14: #{tpu_custom_call.1} parent=1 // pred_check
      _
    $region15: #{tpu_custom_call.1} parent=1 // pred_check_branch
      %46 = sbr.rel (0) target = $region17
    $region16: #{tpu_custom_call.1} parent=1 // pred_region
      %s47 = sadd.s32 0, 0
      %p48 = scmp.lt.s32.totalorder %s47, 0
      %s49 = scalar_select %p48, %s47, 0
      %p50 = scmp.lt.s32.totalorder %s49, 0
      %s51 = scalar_select %p50, %s49, 0
      %s52 = smul.addr %s51, 8
      %s53 = scalar_lea.vmem %s3, %s52
      %s54 = sadd.s32 0, 0
      %p55 = scmp.lt.s32.totalorder %s54, 0
      %s56 = scalar_select %p55, %s54, 0
    $region17: #{tpu_custom_call.1} parent=1 // pred_fallthru
      _
    // Predicated region
    $region18: #{tpu_custom_call.1} parent=1 // pred_check
      _
    $region19: #{tpu_custom_call.1} parent=1 // pred_check_branch
      %58 = sbr.rel (0) target = $region21
    $region20: #{tpu_custom_call.1} parent=1 // pred_region
      %59 = dma.done [#allocation5], 128
    $region21: #{tpu_custom_call.1} parent=1 // pred_fallthru
      _
    // Predicated region
    $region22: #{tpu_custom_call.1} parent=1 // pred_check
      _
    $region23: #{tpu_custom_call.1} parent=1 // pred_check_branch
      %61 = sbr.rel (0) target = $region25
    $region24: #{tpu_custom_call.1} parent=1 // pred_region
      %62 = dma.done [#allocation8], 128
    $region25: #{tpu_custom_call.1} parent=1 // pred_fallthru
      _
    %s63 = sadd.s32 0, 0
    %p64 = scmp.lt.s32.totalorder %s63, 0
    %s65 = scalar_select %p64, %s63, 0
    %p66 = scmp.lt.s32.totalorder %s65, 0
    %s67 = scalar_select %p66, %s65, 0
    %s68 = smul.addr %s67, 8
    %s69 = scalar_lea.vmem %s3, %s68
    %s70 = sadd.s32 0, 0
    %p71 = scmp.lt.s32.totalorder %s70, 0
    %s72 = scalar_select %p71, %s70, 0
    %s73 = sadd.s32 0, 0
    %p74 = scmp.lt.s32.totalorder %s73, 0
    %s75 = scalar_select %p74, %s73, 0
    %s76 = sadd.s32 0, 0
    %p77 = scmp.lt.s32.totalorder %s76, 0
    %s78 = scalar_select %p77, %s76, 0
    %p79 = scmp.lt.s32.totalorder %s78, 0
    %s80 = scalar_select %p79, %s78, 0
    %s81 = smul.addr %s80, 8
    %s82 = scalar_lea.vmem %s3, %s81
    %s83 = sadd.s32 0, 0
    %p84 = scmp.lt.s32.totalorder %s83, 0
    %s85 = scalar_select %p84, %s83, 0
    %p86 = scmp.eq.s32.totalorder 0, 0
    // Predicated region
    $region26: #{tpu_custom_call.1} parent=1 // pred_check
      %p87 = pneg %p86
    $region27: #{tpu_custom_call.1} parent=1 // pred_check_branch
      %89 = sbr.rel (%p87) target = $region29
    $region28: #{tpu_custom_call.1} parent=1 // pred_region
      %vm90 = vcmask 7168
      %91 = vst.msk [vmem:[#allocation2] sm:$0xff] %vm90, 0.0
    $region29: #{tpu_custom_call.1} parent=1 // pred_fallthru
      _
    %v92 = vld [vmem:[#allocation4] sm:$0xff]
    %v93 = vld [vmem:[#allocation7] sm:$0xff]
    %v94 = vld [vmem:[%s82] sm:$0xff]
    %v95 = vadd.f32 %v92, 1e-06
    %v96 = vsub.f32 %v95, %v93
    %v97 = vsub.f32 %v95, %v94
    %v98 = vmul.f32 %v96, %v96
    %vm99 = vcmask 261120
    %v100 = vsel %vm99, %v98, 0.0
    %101 = vadd.xlane.f32.xlu0 %v100
    %v102 = vpop.xlane.xlu0 %101
    %v103 = vrsqrt.pop %v102
    %v104 = vmul.f32 %v102, %v103
    %vm105 = vcmp.eq.f32.partialorder %v102, inf
    %v106 = vsel %vm105, %v102, %v104
    %vm107 = vcmp.eq.f32.partialorder %v102, 0.0
    %v108 = vand.u32 %v102, 2147483648
    %v109 = vsel %vm107, %v108, %v106
    %v110 = vmul.f32 %v97, %v97
    %v111 = vsel %vm99, %v110, 0.0
    %112 = vadd.xlane.f32.xlu0 %v111
    %v113 = vpop.xlane.xlu0 %112
    %v114 = vrsqrt.pop %v113
    %v115 = vmul.f32 %v113, %v114
    %vm116 = vcmp.eq.f32.partialorder %v113, inf
    %v117 = vsel %vm116, %v113, %v115
    %vm118 = vcmp.eq.f32.partialorder %v113, 0.0
    %v119 = vand.u32 %v113, 2147483648
    %v120 = vsel %vm118, %v119, %v117
    %v121 = vsub.f32 %v109, %v120
    %s122 = sld [smem:[#allocation3]]
    %v123 = vstv %s122
    %v124 = vadd.f32 %v121, %v123
    %v125 = vmax.f32 %v124, 0.0
    %s126 = sadd.s32 0, 0
    %s127 = smul.u32 %s126, 8
    %v128 = vlaneseq
    %v129 = vshrl.u32 %v128, 7
    %v130 = vstv %s127
    %v131 = vadd.s32 %v130, %v129
    %vm132 = vcmp.lt.s32.totalorder %v131, 8
    %v133 = vsel %vm132, %v125, 0.0
    %v134 = vld [vmem:[#allocation2] sm:$0xff]
    %v135 = vadd.f32 %v134, %v133
    %vm136 = vcmask 7168
    %137 = vst.msk [vmem:[#allocation2] sm:$0xff] %vm136, %v135
    // Predicated region
    $region30: #{tpu_custom_call.1} parent=1 // pred_check
      %p138 = pneg %p86
    $region31: #{tpu_custom_call.1} parent=1 // pred_check_branch
      %140 = sbr.rel (%p138) target = $region33
    $region32: #{tpu_custom_call.1} parent=1 // pred_region
      %v141 = vld [vmem:[#allocation2] sm:$0xff]
      %v142 = vsel %vm136, %v141, 0.0
      %143 = vadd.xlane.f32.xlu0 %v142
      %v144 = vpop.xlane.xlu0 %143
      %v145 = vrot.slane %v144, 4
      %v146 = vadd.f32 %v144, %v145
      %v147 = vrot.slane %v146, 2
      %v148 = vadd.f32 %v146, %v147
      %v149 = vrot.slane %v148, 1
      %v150 = vadd.f32 %v148, %v149
      %s151 = vtos %v150
      %v152 = vstv %s151
      %vm153 = vcmask 0
      %154 = vst.msk [vmem:[#allocation9] sm:$0x1] %vm153, %v152
    $region33: #{tpu_custom_call.1} parent=1 // pred_fallthru
      _
    // Predicated region
    $region34: #{tpu_custom_call.1} parent=1 // pred_check
      _
    $region35: #{tpu_custom_call.1} parent=1 // pred_check_branch
      %156 = sbr.rel (0) target = $region37
    $region36: #{tpu_custom_call.1} parent=1 // pred_region
      %s158 = ssub.s32 16, 16
      %159 = vsyncadd [#allocation6], %s158
      %s161 = sshll.u32 [#allocation9], 4
      %s162 = int_to_ptr.vmem [resolvable:$true] %s161
      %164 = dma.vmem_to_hbm [thread:$0]  %s162, 16, %s4, [#allocation6]
    $region37: #{tpu_custom_call.1} parent=1 // pred_fallthru
      _
    // Predicated region
    $region38: #{tpu_custom_call.1} parent=1 // pred_check
      _
    $region39: #{tpu_custom_call.1} parent=1 // pred_check_branch
      %166 = sbr.rel (0) target = $region41
    $region40: #{tpu_custom_call.1} parent=1 // pred_region
      %167 = dma.done [#allocation6], 16
    $region41: #{tpu_custom_call.1} parent=1 // pred_fallthru
      _
    %168 = vsyncpa [#allocation5], 1
    %169 = vsyncpa [#allocation8], 1
    %170 = vsyncpa [#allocation6], 1

</llo_original>
